<compile_context>
chip_gen: v7x
topology: tpu7x:2x2x1
jax: 0.10.0
libtpu: 0.0.40
codegen_flags: <defaults>
</compile_context>

<pallas_src>
import functools

import jax
import jax.numpy as jnp
from jax.experimental import pallas as pl
from jax.experimental.pallas import tpu as pltpu

NEG_SLOPE = 0.01     # nn.LeakyReLU() default negative_slope
_MXU = 256           # systolic width on v6e/v7x; a multiple of v5e's 128
_SUBLANE_BF16 = 16   # bf16 vregs pack [16, 128]


def _round_up(x: int, m: int) -> int:
    return ((x + m - 1) // m) * m


@functools.lru_cache(maxsize=None)
def _vmem_capacity_bytes() -> int:
    """Physical VMEM per core; conservative (v7x, 64 MiB) fallback."""
    try:
        info = pltpu.get_tpu_info()
        cap = getattr(info, "vmem_capacity_bytes", None)
        if cap:
            return int(cap)
    except Exception:
        pass
    return 64 << 20


@functools.lru_cache(maxsize=None)
def _default_blocks() -> tuple:
    # v5e/v6e (128 MiB VMEM): fatter K/N tiles.  v7x (64 MiB): 512/1024/1024.
    if _vmem_capacity_bytes() >= (100 << 20):
        return 512, 2048, 2048
    return 512, 1024, 1024


def _padded_nk(in_features, out_features, block_n, block_k):
    bn = min(block_n, _round_up(out_features, _MXU))
    bk = min(block_k, _round_up(in_features, _MXU))
    return _round_up(in_features, bk), _round_up(out_features, bn), bn, bk


def _select_tiles(batch, in_features, out_features, block_m, block_n, block_k):
    kp, np_, bn, bk = _padded_nk(in_features, out_features, block_n, block_k)
    bm = min(block_m, _round_up(batch, _SUBLANE_BF16))
    mp = _round_up(batch, bm)
    # Feed both TensorCores on megacore chips: ensure >=2 parallel blocks
    # (halving bn keeps np_ % bn == 0 and bn a multiple of 256).
    if (mp // bm) * (np_ // bn) == 1 and bn >= 2 * _MXU:
        bn //= 2
    return bm, bn, bk, mp, np_, kp


def _linear_leaky_kernel_acc(x_ref, wt_ref, b_ref, o_ref, acc_ref):
    """Multi-K-tile path: f32 VMEM accumulator, init/epilogue gated on k."""
    k = pl.program_id(2)

    @pl.when(k == 0)
    def _init():
        acc_ref[...] = jnp.zeros_like(acc_ref)

    # bf16 operands, f32 accumulation on the MXU.
    acc_ref[...] += jnp.dot(
        x_ref[...], wt_ref[...], preferred_element_type=jnp.float32
    )

    @pl.when(k == pl.num_programs(2) - 1)
    def _epilogue():
        y = acc_ref[...] + b_ref[...]                 # f32 bias add
        y = jnp.where(y >= 0.0, y, NEG_SLOPE * y)     # LeakyReLU in f32 (VPU)
        o_ref[...] = y.astype(o_ref.dtype)
    # TODO(synk): dropout is identity here (dropout_rate=0.0 default / eval);
    # training-mode dropout would use pltpu.prng_seed + pltpu.prng_random_bits.


def _linear_leaky_kernel_single_k(x_ref, wt_ref, b_ref, o_ref):
    """Single-K-tile path: no accumulator scratch, no pl.when gating."""
    y = jnp.dot(x_ref[...], wt_ref[...], preferred_element_type=jnp.float32)
    y = y + b_ref[...]
    y = jnp.where(y >= 0.0, y, NEG_SLOPE * y)
    o_ref[...] = y.astype(o_ref.dtype)


@functools.partial(
    jax.jit,
    static_argnames=("out_features", "block_m", "block_n", "block_k", "out_dtype"),
)
def linear_network_forward(x, wt, b, *, out_features=None, block_m=None,
                           block_n=None, block_k=None, out_dtype=None):
    """y = leaky_relu(x @ wt + b).

    x : (batch, in_features)                       any float dtype
    wt : (in_features[+pad], out_features[+pad])   transposed PyTorch weight,
         ideally pre-padded + bf16 from init_linear_params (no per-call prep).
    b  : (1, out_features[+pad]) or (out_features,)
    out_features : logical output width (required if wt is pre-padded).
    """
    dbm, dbn, dbk = _default_blocks()
    block_m = block_m or dbm
    block_n = block_n or dbn
    block_k = block_k or dbk

    batch, in_features = x.shape
    if out_features is None:
        out_features = wt.shape[1]
    out_dtype = out_dtype or x.dtype

    bm, bn, bk, mp, np_, kp = _select_tiles(
        batch, in_features, out_features, block_m, block_n, block_k)

    # --- params: pad/cast only if not already prepared at init --------------
    if wt.shape != (kp, np_):
        wt = jnp.pad(wt, ((0, kp - wt.shape[0]), (0, np_ - wt.shape[1])))
    if wt.dtype != jnp.bfloat16:
        wt = wt.astype(jnp.bfloat16)

    b = b.reshape(1, -1)
    if b.shape[1] != np_:
        b = jnp.pad(b, ((0, 0), (0, np_ - b.shape[1])))
    if b.dtype != jnp.float32:
        b = b.astype(jnp.float32)

    # --- activations: pad to tile multiples (lane-dense N), cast to bf16 ----
    if (batch, in_features) != (mp, kp):
        x = jnp.pad(x, ((0, mp - batch), (0, kp - in_features)))
    if x.dtype != jnp.bfloat16:
        x = x.astype(jnp.bfloat16)

    out_isz = jnp.dtype(out_dtype).itemsize
    n_k = kp // bk
    single_k = (n_k == 1)

    # Live-VMEM budget with double buffering (+ f32 accumulator on multi-K).
    vmem_bytes = (
        2 * (bm * bk * 2)                      # x tile, bf16
        + 2 * (bk * bn * 2)                    # wt tile, bf16
        + 2 * (bn * 4)                         # bias tile, f32
        + 2 * (bm * bn * out_isz)              # out tile
        + (0 if single_k else bm * bn * 4)     # f32 accumulator scratch
    )
    vmem_cap = (96 << 20) if _vmem_capacity_bytes() >= (100 << 20) else (48 << 20)
    vmem_limit = min(max(vmem_bytes + (4 << 20), 32 << 20), vmem_cap)

    cost = pl.CostEstimate(
        flops=2 * mp * np_ * kp,
        transcendentals=0,
        bytes_accessed=(mp * kp * 2 + (mp // bm) * kp * np_ * 2
                        + np_ * 4 + mp * np_ * out_isz),
    )

    if single_k:
        grid_spec = pltpu.PrefetchScalarGridSpec(
            num_scalar_prefetch=0,
            grid=(mp // bm, np_ // bn),
            in_specs=[
                pl.BlockSpec((bm, bk), lambda i, j: (i, 0)),
                pl.BlockSpec((bk, bn), lambda i, j: (0, j)),
                pl.BlockSpec((1, bn), lambda i, j: (0, j)),
            ],
            out_specs=pl.BlockSpec((bm, bn), lambda i, j: (i, j)),
        )
        kernel = _linear_leaky_kernel_single_k
        dim_sem = ("parallel", "parallel")
    else:
        grid_spec = pltpu.PrefetchScalarGridSpec(
            num_scalar_prefetch=0,
            grid=(mp // bm, np_ // bn, n_k),
            in_specs=[
                pl.BlockSpec((bm, bk), lambda i, j, k: (i, k)),
                pl.BlockSpec((bk, bn), lambda i, j, k: (k, j)),
                pl.BlockSpec((1, bn), lambda i, j, k: (0, j)),
            ],
            out_specs=pl.BlockSpec((bm, bn), lambda i, j, k: (i, j)),
            scratch_shapes=[pltpu.VMEM((bm, bn), jnp.float32)],
        )
        kernel = _linear_leaky_kernel_acc
        dim_sem = ("parallel", "parallel", "arbitrary")

    out_padded = pl.pallas_call(
        kernel,
        out_shape=jax.ShapeDtypeStruct((mp, np_), out_dtype),
        grid_spec=grid_spec,
        compiler_params=pltpu.CompilerParams(
            dimension_semantics=dim_sem,
            vmem_limit_bytes=vmem_limit,
        ),
        cost_estimate=cost,
    )(x, wt, b)

    if (mp, np_) != (batch, out_features):
        out_padded = out_padded[:batch, :out_features]
    return out_padded


def init_linear_params(key, in_features, out_features, *,
                       block_n=None, block_k=None):
    """Mirror the PyTorch module init and pre-prepare params for the kernel:
      - weight: kaiming_normal_ (fan_in, leaky_relu gain) on shape (out, in)
      - bias:   nn.Linear default uniform(-1/sqrt(in), 1/sqrt(in))
    Returned weight is transposed -> (in, out), zero-padded to the kernel's
    tile grid and cast to bf16; bias is (1, out) zero-padded, f32.  Doing this
    once at init removes a full weight HBM round-trip from every forward call.
    """
    dbm, dbn, dbk = _default_blocks()
    block_n = block_n or dbn
    block_k = block_k or dbk

    k_w, k_b = jax.random.split(key)
    gain = jnp.sqrt(2.0)                        # kaiming gain for leaky_relu, a=0
    std = gain / jnp.sqrt(float(in_features))   # fan_in = in_features
    w = jax.random.normal(k_w, (out_features, in_features), jnp.float32) * std
    bound = 1.0 / jnp.sqrt(float(in_features))
    b = jax.random.uniform(k_b, (out_features,), jnp.float32, -bound, bound)

    kp, np_, _, _ = _padded_nk(in_features, out_features, block_n, block_k)
    wt = jnp.pad(w.T, ((0, kp - in_features), (0, np_ - out_features)))
    b = jnp.pad(b.reshape(1, out_features), ((0, 0), (0, np_ - out_features)))
    return wt.astype(jnp.bfloat16), b.astype(jnp.float32)


if __name__ == "__main__":
    key = jax.random.PRNGKey(0)
    k_x, k_p = jax.random.split(key)

    batch, in_features, out_features = 8, 32, 64
    x = jax.random.normal(k_x, (batch, in_features), jnp.float32)
    wt, b = init_linear_params(k_p, in_features, out_features)  # padded, bf16/f32

    y = linear_network_forward(x, wt, b, out_features=out_features)
    y = jax.block_until_ready(y)

    # Sanity check against a plain-JAX reference (kernel uses bf16 operands,
    # f32 accumulation -> loosened tolerance).
    wt_f32 = wt[:in_features, :out_features].astype(jnp.float32)
    b_f32 = b[:, :out_features]
    y_ref = x @ wt_f32 + b_f32
    y_ref = jnp.where(y_ref >= 0.0, y_ref, NEG_SLOPE * y_ref)

    assert y.shape == (batch, out_features)
    assert jnp.allclose(y, y_ref, atol=5e-2, rtol=5e-2), float(
        jnp.max(jnp.abs(y - y_ref))
    )

    print("KERNEL_OK")
</pallas_src>

<mosaic_0001>
module attributes {stable_mosaic.version = 11 : i64} {
  func.func @_linear_leaky_kernel_single_k(%arg0: i32, %arg1: i32, %arg2: memref<16x256xbf16, #tpu.memory_space<vmem>>, %arg3: memref<256x256xbf16, #tpu.memory_space<vmem>>, %arg4: memref<1x256xf32, #tpu.memory_space<vmem>>, %arg5: memref<16x256xf32, #tpu.memory_space<vmem>>) attributes {dimension_semantics = [#tpu.dimension_semantics<parallel>, #tpu.dimension_semantics<parallel>], iteration_bounds = array<i64: 1, 1>, scalar_prefetch = 0 : i64, scratch_operands = 0 : i64, tpu.core_type = #tpu.core_type<tc>, window_params = [{transform_indices = @transform_0, window_bounds = array<i64: 16, 256>}, {transform_indices = @transform_1, window_bounds = array<i64: 256, 256>}, {transform_indices = @transform_2, window_bounds = array<i64: 1, 256>}, {transform_indices = @transform_3, window_bounds = array<i64: 16, 256>}]} {
    %c0 = arith.constant 0 : index
    %c0_0 = arith.constant 0 : index
    %0 = vector.load %arg2[%c0, %c0_0] : memref<16x256xbf16, #tpu.memory_space<vmem>>, vector<16x256xbf16>
    %c0_1 = arith.constant 0 : index
    %c0_2 = arith.constant 0 : index
    %1 = vector.load %arg3[%c0_1, %c0_2] : memref<256x256xbf16, #tpu.memory_space<vmem>>, vector<256x256xbf16>
    %cst = arith.constant dense<0.000000e+00> : vector<16x256xf32>
    %2 = tpu.matmul %0, %1, %cst {dimension_numbers = #tpu.dot_dimension_numbers<[1], [0], [0], [1], [0, 0, 1, 1], [], []>} : vector<16x256xbf16>, vector<256x256xbf16>, vector<16x256xf32> -> vector<16x256xf32>
    %c0_3 = arith.constant 0 : index
    %c0_4 = arith.constant 0 : index
    %3 = vector.load %arg4[%c0_3, %c0_4] : memref<1x256xf32, #tpu.memory_space<vmem>>, vector<1x256xf32>
    %4 = vector.broadcast %3 : vector<1x256xf32> to vector<16x256xf32>
    %5 = arith.addf %2, %4 : vector<16x256xf32>
    %cst_5 = arith.constant 0.000000e+00 : f32
    %6 = vector.broadcast %cst_5 : f32 to vector<16x256xf32>
    %7 = arith.cmpf oge, %5, %6 : vector<16x256xf32>
    %cst_6 = arith.constant 0.00999999977 : f32
    %8 = vector.broadcast %cst_6 : f32 to vector<16x256xf32>
    %9 = arith.mulf %8, %5 : vector<16x256xf32>
    %10 = arith.select %7, %5, %9 : vector<16x256xi1>, vector<16x256xf32>
    %c0_7 = arith.constant 0 : index
    %c0_8 = arith.constant 0 : index
    %11 = vector.load %arg5[%c0_7, %c0_8] : memref<16x256xf32, #tpu.memory_space<vmem>>, vector<16x256xf32>
    tpu.vector_store %arg5[%c0_7, %c0_8], %10 {strides = array<i32>} : memref<16x256xf32, #tpu.memory_space<vmem>>, vector<16x256xf32>,
    return
  }
  func.func @transform_0(%arg0: i32, %arg1: i32) -> (i32, i32) {
    %c0_i32 = arith.constant 0 : i32
    %c0_i32_0 = arith.constant 0 : i32
    return %arg0, %c0_i32 : i32, i32
  }
  func.func @transform_1(%arg0: i32, %arg1: i32) -> (i32, i32) {
    %c0_i32 = arith.constant 0 : i32
    %c0_i32_0 = arith.constant 0 : i32
    return %c0_i32, %arg1 : i32, i32
  }
  func.func @transform_2(%arg0: i32, %arg1: i32) -> (i32, i32) {
    %c0_i32 = arith.constant 0 : i32
    %c0_i32_0 = arith.constant 0 : i32
    return %c0_i32, %arg1 : i32, i32
  }
  func.func @transform_3(%arg0: i32, %arg1: i32) -> (i32, i32) {
    %c0_i32 = arith.constant 0 : i32
    return %arg0, %arg1 : i32, i32
  }
}

</mosaic_0001>

<llo_original>
// kernel: linear_network_forward.1
$region0: #{linear_network_forward.1}
  #allocation0 [shape = 'u32[]', space=smem, size = 0x4, offset = 0x4, fixed_abs, tag = 'smem constant byte address 0x4 - core index']
  #allocation1 [shape = 'u32[144,128]{1,0:T(1,128)}', space=vmem, size = 0x12000, scoped, tag = 'internal scratch']
  %s0 = inlined_call_operand.vmem [shape: bf16[16,256], index: 0, kind: input, shape index: {}]
  %s1 = inlined_call_operand.hbm [shape: bf16[256,256], index: 1, kind: input, shape index: {}]
  %s2 = inlined_call_operand.vmem [shape: f32[1,256], index: 2, kind: input, shape index: {}]
  %s3 = inlined_call_operand.vmem [shape: f32[16,256], index: 3, kind: output, shape index: {}]
  %s4 = sld [smem:[#allocation0]]
  $region26: #{linear_network_forward.1} parent=0
    _
  %s6 = ssub.s32 1, %s4
  %s7 = scalar_select 0, %s6, %s4
  $region1: #{linear_network_forward.1} parent=0
    #allocation2 [shape = 'u8[131072]{0}', space=vmem, size = 0x20000, scoped, tag = 'input window, operand 1, single buffered']
    #allocation3 [shape = 's32[1]{0}', space=sflag, size = 0x4, scoped, tag = 'scoped memory for linear_network_forward.1']
    %8 = vsyncpa [#allocation3], 0
    // Predicated region
    $region2: #{linear_network_forward.1} parent=1 // pred_check
      _
    $region3: #{linear_network_forward.1} parent=1 // pred_check_branch
      %10 = sbr.rel (0) target = $region5
    $region4: #{linear_network_forward.1} parent=1 // pred_region
      _
    $region5: #{linear_network_forward.1} parent=1 // pred_fallthru
      _
    // Predicated region
    $region6: #{linear_network_forward.1} parent=1 // pred_check
      _
    $region7: #{linear_network_forward.1} parent=1 // pred_check_branch
      %12 = sbr.rel (0) target = $region9
    $region8: #{linear_network_forward.1} parent=1 // pred_region
      %s14 = ssub.s32 4096, 4096
      %15 = vsyncadd [#allocation3], %s14
      %s16 = sshll.u32 [#allocation2], 4
      %s17 = int_to_ptr.vmem [resolvable:$true] %s16
      %22 = dma.hbm_to_vmem [thread:$0]  %s1, 4096, %s17, [#allocation3], 128, 128, 8
    $region9: #{linear_network_forward.1} parent=1 // pred_fallthru
      _
    // Predicated region
    $region10: #{linear_network_forward.1} parent=1 // pred_check
      _
    $region11: #{linear_network_forward.1} parent=1 // pred_check_branch
      %24 = sbr.rel (0) target = $region13
    $region12: #{linear_network_forward.1} parent=1 // pred_region
      _
    $region13: #{linear_network_forward.1} parent=1 // pred_fallthru
      _
    // Predicated region
    $region14: #{linear_network_forward.1} parent=1 // pred_check
      _
    $region15: #{linear_network_forward.1} parent=1 // pred_check_branch
      %26 = sbr.rel (0) target = $region17
    $region16: #{linear_network_forward.1} parent=1 // pred_region
      %27 = dma.done [#allocation3], 4096
    $region17: #{linear_network_forward.1} parent=1 // pred_fallthru
      _
    %v28 = vld [vmem:[%s0] sm:$0xff]
    %v29 = vld [vmem:[%s0 + $0x8] sm:$0xff]
    %v30 = vld [vmem:[#allocation2] sm:$0xff]
    %v31 = vld [vmem:[#allocation2 + $0x8] sm:$0xff]
    %v32 = vld [vmem:[#allocation2 + $0x10] sm:$0xff]
    %v33 = vld [vmem:[#allocation2 + $0x18] sm:$0xff]
    %v34 = vld [vmem:[#allocation2 + $0x20] sm:$0xff]
    %v35 = vld [vmem:[#allocation2 + $0x28] sm:$0xff]
    %v36 = vld [vmem:[#allocation2 + $0x30] sm:$0xff]
    %v37 = vld [vmem:[#allocation2 + $0x38] sm:$0xff]
    %v38 = vld [vmem:[#allocation2 + $0x40] sm:$0xff]
    %v39 = vld [vmem:[#allocation2 + $0x48] sm:$0xff]
    %v40 = vld [vmem:[#allocation2 + $0x50] sm:$0xff]
    %v41 = vld [vmem:[#allocation2 + $0x58] sm:$0xff]
    %v42 = vld [vmem:[#allocation2 + $0x60] sm:$0xff]
    %v43 = vld [vmem:[#allocation2 + $0x68] sm:$0xff]
    %v44 = vld [vmem:[#allocation2 + $0x70] sm:$0xff]
    %v45 = vld [vmem:[#allocation2 + $0x78] sm:$0xff]
    %v46 = vld [vmem:[#allocation2 + $0x80] sm:$0xff]
    %v47 = vld [vmem:[#allocation2 + $0x88] sm:$0xff]
    %v48 = vld [vmem:[#allocation2 + $0x90] sm:$0xff]
    %v49 = vld [vmem:[#allocation2 + $0x98] sm:$0xff]
    %v50 = vld [vmem:[#allocation2 + $0xa0] sm:$0xff]
    %v51 = vld [vmem:[#allocation2 + $0xa8] sm:$0xff]
    %v52 = vld [vmem:[#allocation2 + $0xb0] sm:$0xff]
    %v53 = vld [vmem:[#allocation2 + $0xb8] sm:$0xff]
    %v54 = vld [vmem:[#allocation2 + $0xc0] sm:$0xff]
    %v55 = vld [vmem:[#allocation2 + $0xc8] sm:$0xff]
    %v56 = vld [vmem:[#allocation2 + $0xd0] sm:$0xff]
    %v57 = vld [vmem:[#allocation2 + $0xd8] sm:$0xff]
    %v58 = vld [vmem:[#allocation2 + $0xe0] sm:$0xff]
    %v59 = vld [vmem:[#allocation2 + $0xe8] sm:$0xff]
    %v60 = vld [vmem:[#allocation2 + $0xf0] sm:$0xff]
    %v61 = vld [vmem:[#allocation2 + $0xf8] sm:$0xff]
    %v62 = vld [vmem:[%s2] sm:$0x3]
    %v64 = vlaneseq
    %v65 = vshrl.u32 %v64, 7
    %v66 = vsub.s32 0, %v65
    %v67 = vrot.slane %v62, %v66
    %v68 = vlaneseq
    %v69 = vshrl.u32 %v68, 7
    %v70 = vsub.s32 1, %v69
    %v71 = vrot.slane %v62, %v70
    %v76 = vunpack.c.l.b16 %v28
    %v77 = vunpack.c.h.b16 %v28
    %v78 = vunpack.c.l.b16 %v29
    %v79 = vunpack.c.h.b16 %v29
    %v80 = vpack.c.b16 %v78, %v76
    %v81 = vpack.c.b16 %v79, %v77
    %v116 = vunpack.c.l.b16 %v30
    %v117 = vunpack.c.h.b16 %v30
    %v118 = vunpack.c.l.b16 %v31
    %v119 = vunpack.c.h.b16 %v31
    %v120 = vunpack.c.l.b16 %v32
    %v121 = vunpack.c.h.b16 %v32
    %v122 = vunpack.c.l.b16 %v33
    %v123 = vunpack.c.h.b16 %v33
    %v124 = vunpack.c.l.b16 %v34
    %v125 = vunpack.c.h.b16 %v34
    %v126 = vunpack.c.l.b16 %v35
    %v127 = vunpack.c.h.b16 %v35
    %v128 = vunpack.c.l.b16 %v36
    %v129 = vunpack.c.h.b16 %v36
    %v130 = vunpack.c.l.b16 %v37
    %v131 = vunpack.c.h.b16 %v37
    %v132 = vunpack.c.l.b16 %v38
    %v133 = vunpack.c.h.b16 %v38
    %v134 = vunpack.c.l.b16 %v39
    %v135 = vunpack.c.h.b16 %v39
    %v136 = vunpack.c.l.b16 %v40
    %v137 = vunpack.c.h.b16 %v40
    %v138 = vunpack.c.l.b16 %v41
    %v139 = vunpack.c.h.b16 %v41
    %v140 = vunpack.c.l.b16 %v42
    %v141 = vunpack.c.h.b16 %v42
    %v142 = vunpack.c.l.b16 %v43
    %v143 = vunpack.c.h.b16 %v43
    %v144 = vunpack.c.l.b16 %v44
    %v145 = vunpack.c.h.b16 %v44
    %v146 = vunpack.c.l.b16 %v45
    %v147 = vunpack.c.h.b16 %v45
    %v148 = vunpack.c.l.b16 %v46
    %v149 = vunpack.c.h.b16 %v46
    %v150 = vunpack.c.l.b16 %v47
    %v151 = vunpack.c.h.b16 %v47
    %v152 = vunpack.c.l.b16 %v48
    %v153 = vunpack.c.h.b16 %v48
    %v154 = vunpack.c.l.b16 %v49
    %v155 = vunpack.c.h.b16 %v49
    %v156 = vunpack.c.l.b16 %v50
    %v157 = vunpack.c.h.b16 %v50
    %v158 = vunpack.c.l.b16 %v51
    %v159 = vunpack.c.h.b16 %v51
    %v160 = vunpack.c.l.b16 %v52
    %v161 = vunpack.c.h.b16 %v52
    %v162 = vunpack.c.l.b16 %v53
    %v163 = vunpack.c.h.b16 %v53
    %v164 = vunpack.c.l.b16 %v54
    %v165 = vunpack.c.h.b16 %v54
    %v166 = vunpack.c.l.b16 %v55
    %v167 = vunpack.c.h.b16 %v55
    %v168 = vunpack.c.l.b16 %v56
    %v169 = vunpack.c.h.b16 %v56
    %v170 = vunpack.c.l.b16 %v57
    %v171 = vunpack.c.h.b16 %v57
    %v172 = vunpack.c.l.b16 %v58
    %v173 = vunpack.c.h.b16 %v58
    %v174 = vunpack.c.l.b16 %v59
    %v175 = vunpack.c.h.b16 %v59
    %v176 = vunpack.c.l.b16 %v60
    %v177 = vunpack.c.h.b16 %v60
    %v178 = vunpack.c.l.b16 %v61
    %v179 = vunpack.c.h.b16 %v61
    %v180 = vpack.c.b16 %v118, %v116
    %v181 = vpack.c.b16 %v119, %v117
    %v182 = vpack.c.b16 %v122, %v120
    %v183 = vpack.c.b16 %v123, %v121
    %v184 = vpack.c.b16 %v126, %v124
    %v185 = vpack.c.b16 %v127, %v125
    %v186 = vpack.c.b16 %v130, %v128
    %v187 = vpack.c.b16 %v131, %v129
    %v188 = vpack.c.b16 %v134, %v132
    %v189 = vpack.c.b16 %v135, %v133
    %v190 = vpack.c.b16 %v138, %v136
    %v191 = vpack.c.b16 %v139, %v137
    %v192 = vpack.c.b16 %v142, %v140
    %v193 = vpack.c.b16 %v143, %v141
    %v194 = vpack.c.b16 %v146, %v144
    %v195 = vpack.c.b16 %v147, %v145
    %v196 = vpack.c.b16 %v150, %v148
    %v197 = vpack.c.b16 %v151, %v149
    %v198 = vpack.c.b16 %v154, %v152
    %v199 = vpack.c.b16 %v155, %v153
    %v200 = vpack.c.b16 %v158, %v156
    %v201 = vpack.c.b16 %v159, %v157
    %v202 = vpack.c.b16 %v162, %v160
    %v203 = vpack.c.b16 %v163, %v161
    %v204 = vpack.c.b16 %v166, %v164
    %v205 = vpack.c.b16 %v167, %v165
    %v206 = vpack.c.b16 %v170, %v168
    %v207 = vpack.c.b16 %v171, %v169
    %v208 = vpack.c.b16 %v174, %v172
    %v209 = vpack.c.b16 %v175, %v173
    %v210 = vpack.c.b16 %v178, %v176
    %v211 = vpack.c.b16 %v179, %v177
    %244 = vmatprep.subr.bf16.mxu0 %v181
    %245 = vmatpush1.bf16.msra.mxu0 %v180
    %246 = vmatprep.subr.bf16.mxu0 %v183
    %247 = vmatpush1.bf16.msra.mxu0 %v182
    %248 = vmatprep.subr.bf16.mxu0 %v185
    %249 = vmatpush1.bf16.msra.mxu0 %v184
    %250 = vmatprep.subr.bf16.mxu0 %v187
    %251 = vmatpush1.bf16.msra.mxu0 %v186
    %252 = vmatprep.subr.bf16.mxu0 %v189
    %253 = vmatpush1.bf16.msra.mxu0 %v188
    %254 = vmatprep.subr.bf16.mxu0 %v191
    %255 = vmatpush1.bf16.msra.mxu0 %v190
    %256 = vmatprep.subr.bf16.mxu0 %v193
    %257 = vmatpush1.bf16.msra.mxu0 %v192
    %258 = vmatprep.subr.bf16.mxu0 %v195
    %259 = vmatpush1.bf16.msra.mxu0 %v194
    %260 = vmatprep.subr.bf16.mxu0 %v197
    %261 = vmatpush1.bf16.msra.mxu0 %v196
    %262 = vmatprep.subr.bf16.mxu0 %v199
    %263 = vmatpush1.bf16.msra.mxu0 %v198
    %264 = vmatprep.subr.bf16.mxu0 %v201
    %265 = vmatpush1.bf16.msra.mxu0 %v200
    %266 = vmatprep.subr.bf16.mxu0 %v203
    %267 = vmatpush1.bf16.msra.mxu0 %v202
    %268 = vmatprep.subr.bf16.mxu0 %v205
    %269 = vmatpush1.bf16.msra.mxu0 %v204
    %270 = vmatprep.subr.bf16.mxu0 %v207
    %271 = vmatpush1.bf16.msra.mxu0 %v206
    %272 = vmatprep.subr.bf16.mxu0 %v209
    %273 = vmatpush1.bf16.msra.mxu0 %v208
    %274 = vmatprep.subr.bf16.mxu0 %v211
    %275 = vmatpush1.bf16.msra.mxu0 %v210
    %276 = vmatprep.mubr.bf16.mxu0 %v81
    %277 = vmatmul.mubr.bf16.gmra.mrb[0].mxu0 %v80
    %v278 = vpop.f32.mrb[0].mxu0
    %v279 = vadd.f32 %v67, %v278
    %v280 = vpop.f32.mrb[0].mxu0
    %v281 = vadd.f32 %v71, %v280
    %v282 = vpop.f32.mrb[0].mxu0
    %v283 = vadd.f32 %v67, %v282
    %v284 = vpop.f32.mrb[0].mxu0
    %v285 = vadd.f32 %v71, %v284
    %286 = vdwg.mxu0
    %vm287 = vcmp.ge.f32.partialorder %v279, 0.0
    %vm288 = vcmp.ge.f32.partialorder %v281, 0.0
    %vm289 = vcmp.ge.f32.partialorder %v283, 0.0
    %vm290 = vcmp.ge.f32.partialorder %v285, 0.0
    %v291 = vmul.f32 %v279, 0.01
    %v292 = vmul.f32 %v281, 0.01
    %v293 = vmul.f32 %v283, 0.01
    %v294 = vmul.f32 %v285, 0.01
    %v295 = vsel %vm287, %v279, %v291
    %v296 = vsel %vm288, %v281, %v292
    %v297 = vsel %vm289, %v283, %v293
    %v298 = vsel %vm290, %v285, %v294
    %299 = vst [vmem:[%s3] sm:$0xff] %v295
    %300 = vst [vmem:[%s3 + $0x8] sm:$0xff] %v296
    %301 = vst [vmem:[%s3 + $0x10] sm:$0xff] %v297
    %302 = vst [vmem:[%s3 + $0x18] sm:$0xff] %v298
    // Predicated region
    $region18: #{linear_network_forward.1} parent=1 // pred_check
      _
    $region19: #{linear_network_forward.1} parent=1 // pred_check_branch
      %304 = sbr.rel (0) target = $region21
    $region20: #{linear_network_forward.1} parent=1 // pred_region
      _
    $region21: #{linear_network_forward.1} parent=1 // pred_fallthru
      _
    // Predicated region
    $region22: #{linear_network_forward.1} parent=1 // pred_check
      _
    $region23: #{linear_network_forward.1} parent=1 // pred_check_branch
      %306 = sbr.rel (0) target = $region25
    $region24: #{linear_network_forward.1} parent=1 // pred_region
      _
    $region25: #{linear_network_forward.1} parent=1 // pred_fallthru
      _
    %307 = vsyncpa [#allocation3], 1

</llo_original>
